<compile_context>
chip_gen: v7x
topology: tpu7x:2x2x1
jax: 0.10.0
libtpu: 0.0.40
codegen_flags: <defaults>
</compile_context>

<pallas_src>
import functools
import math

import jax
import jax.numpy as jnp
from jax.experimental import pallas as pl
from jax.experimental.pallas import tpu as pltpu


# ----------------------------------------------------------------------------
# Pallas kernel
# ----------------------------------------------------------------------------
def _make_encoder_kernel(n_hidden, latent_dim, n_points, tile_rows, n_inner,
                         compute_dtype):
    """Kernel closure for a fixed MLP depth and tiling.

    Ref ordering:
      x_ref,
      (w_ref, b_ref) * n_hidden,
      w_last_ref, b_last_ref,            # fused mu/sigma head, width 2*latent_dim
      sum_mu_out_ref, sum_inv_out_ref,   # (1, 1, L) partial-sum block per outer idx
      acc_mu, acc_inv                    # (1, L) f32 VMEM scratch accumulators
    """

    def kernel(*refs):
        x_ref = refs[0]
        n_in = 1 + 2 * (n_hidden + 1)
        w_last_ref = refs[n_in - 2]
        b_last_ref = refs[n_in - 1]
        sum_mu_out_ref = refs[n_in]
        sum_inv_out_ref = refs[n_in + 1]
        acc_mu = refs[n_in + 2]
        acc_inv = refs[n_in + 3]

        o = pl.program_id(0)   # outer axis: "parallel" (v7x megacore split)
        i = pl.program_id(1)   # inner axis: "arbitrary" (sequential reduction)

        @pl.when(i == 0)
        def _init():
            acc_mu[...] = jnp.zeros_like(acc_mu)
            acc_inv[...] = jnp.zeros_like(acc_inv)

        # ---- per-point MLP on the (tile_rows, input_dim) tile --------------
        h = x_ref[...].astype(compute_dtype)
        idx = 1
        for _ in range(n_hidden):
            w = refs[idx][...]        # (d_in_l, d_out_l), compute_dtype
            b = refs[idx + 1][...]    # (1, d_out_l), float32
            idx += 2
            h = jnp.dot(h, w, preferred_element_type=jnp.float32) + b
            h = jnp.maximum(h, 0.0).astype(compute_dtype)   # nn.ReLU

        # Fused mu/sigma head: one matmul of width 2L (eps folded into bias).
        out = jnp.dot(h, w_last_ref[...], preferred_element_type=jnp.float32)
        out = out + b_last_ref[...]                       # (tile_rows, 2L) f32
        mu_p = out[:, :latent_dim]                        # (tile_rows, L)
        sg_p = out[:, latent_dim:]                        # (tile_rows, L)

        inv_sq = 1.0 / (sg_p * sg_p)                      # 1 / sigma^2

        # Mask rows past the real trajectory length (zero-padded tiles).
        row0 = (o * n_inner + i) * tile_rows
        rows = row0 + jax.lax.broadcasted_iota(jnp.int32, (tile_rows, 1), 0)
        valid = rows < n_points
        contrib_mu = jnp.where(valid, mu_p * inv_sq, 0.0)
        contrib_inv = jnp.where(valid, inv_sq, 0.0)

        acc_mu[...] += jnp.sum(contrib_mu, axis=0, keepdims=True)
        acc_inv[...] += jnp.sum(contrib_inv, axis=0, keepdims=True)

        # Store the partial sums for this outer index exactly once.
        @pl.when(i == n_inner - 1)
        def _finalize():
            sum_mu_out_ref[...] = acc_mu[...].reshape(1, 1, latent_dim)
            sum_inv_out_ref[...] = acc_inv[...].reshape(1, 1, latent_dim)

    return kernel


# ----------------------------------------------------------------------------
# Wrapper
# ----------------------------------------------------------------------------
def encoder_deep_promp_forward(x, params, latent_variable_dimension,
                               *, tile_rows=256, use_bf16=False):
    """EncoderDeepProMP forward with a tiled Pallas TPU kernel.

    x:      (N_points, input_dim) float32  (one row per trajectory point)
    params: list of (W, b), W shape (in, out), b shape (out,); final out == 2L.
    Returns (mu_z, sigma_z_sq), each of shape (L,).
    """
    L = latent_variable_dimension
    n_hidden = len(params) - 1
    n_points, d_in = x.shape
    compute_dtype = jnp.bfloat16 if use_bf16 else jnp.float32

    # Row tile: fill the MXU M dimension (256 works well on v5e/v6e/v7x; sweep
    # 128/256/512 if profiling), never larger than the padded trajectory.
    tn = min(tile_rows, max(8, ((n_points + 7) // 8) * 8))
    n_tiles = (n_points + tn - 1) // tn
    n_outer = 2 if n_tiles >= 2 else 1          # v7x: split point tiles over 2 TCs
    n_inner = (n_tiles + n_outer - 1) // n_outer
    n_pad = n_outer * n_inner * tn

    x_p = jnp.pad(x.astype(compute_dtype), ((0, n_pad - n_points), (0, 0)))

    # eps folded into the final bias (both halves, matching the reference's
    # `mu_points += eps; sigma_points += eps`).  In f32 the 1e-9 is below the
    # bias ulp, exactly like the post-matmul add it replaces.
    eps = jnp.float32(1e-9)

    kernel_inputs = [x_p]
    in_specs = [pl.BlockSpec((tn, d_in), lambda o, i: (o * n_inner + i, 0))]
    for li, (w, b) in enumerate(params):
        b2 = b.reshape(1, -1).astype(jnp.float32)
        if li == n_hidden:
            b2 = b2 + eps
        kernel_inputs.append(w.astype(compute_dtype))
        kernel_inputs.append(b2)
        in_specs.append(pl.BlockSpec(w.shape, lambda o, i: (0, 0)))
        in_specs.append(pl.BlockSpec(b2.shape, lambda o, i: (0, 0)))

    out_shape = (jax.ShapeDtypeStruct((n_outer, 1, L), jnp.float32),
                 jax.ShapeDtypeStruct((n_outer, 1, L), jnp.float32))
    out_specs = (pl.BlockSpec((1, 1, L), lambda o, i: (o, 0, 0)),
                 pl.BlockSpec((1, 1, L), lambda o, i: (o, 0, 0)))

    # Explicit VMEM budget (v7x has only 64 MiB physical VMEM).
    item = 2 if use_bf16 else 4
    param_bytes = sum(w.size * item + b.size * 4 for w, b in params)
    est = (2 * tn * d_in * item          # double-buffered x tile
           + 2 * param_bytes             # resident weights/biases (conservative x2)
           + 2 * n_outer * L * 4 + 2 * L * 4)
    vmem_limit = int(min(max(4 * est + (4 << 20), 16 << 20), 48 << 20))

    neurons = [d_in] + [w.shape[1] for w, _ in params]
    flops = 2 * n_points * sum(neurons[l] * neurons[l + 1]
                               for l in range(len(neurons) - 1))
    bytes_accessed = x.size * item + param_bytes + 2 * n_outer * L * 4

    partial_mu, partial_inv = pl.pallas_call(
        _make_encoder_kernel(n_hidden, L, n_points, tn, n_inner, compute_dtype),
        grid=(n_outer, n_inner),
        in_specs=in_specs,
        out_specs=out_specs,
        out_shape=out_shape,
        scratch_shapes=[pltpu.VMEM((1, L), jnp.float32),
                        pltpu.VMEM((1, L), jnp.float32)],
        compiler_params=pltpu.CompilerParams(
            dimension_semantics=("parallel", "arbitrary"),
            vmem_limit_bytes=vmem_limit),
        cost_estimate=pl.CostEstimate(flops=int(flops), transcendentals=0,
                                      bytes_accessed=int(bytes_accessed)),
    )(*kernel_inputs)

    # O(L) cross-tile / cross-core combine in plain JAX.
    sum_mu = jnp.sum(partial_mu, axis=(0, 1))      # (L,)
    sum_inv = jnp.sum(partial_inv, axis=(0, 1))    # (L,)
    sigma_z_sq = 1.0 / (1.0 + sum_inv)
    mu_z = sigma_z_sq * sum_mu
    return mu_z, sigma_z_sq


# ----------------------------------------------------------------------------
# Deterministic parameter init (mirrors __init_weights: xavier_uniform W, bias=0.05)
# ----------------------------------------------------------------------------
def init_params(key, neurons):
    params = []
    for i in range(len(neurons) - 1):
        fan_in, fan_out = neurons[i], neurons[i + 1]
        bound = math.sqrt(6.0 / (fan_in + fan_out))
        key, sub = jax.random.split(key)
        w = jax.random.uniform(sub, (fan_in, fan_out), jnp.float32, -bound, bound)
        b = jnp.full((fan_out,), 0.05, jnp.float32)
        params.append((w, b))
    return params


# ----------------------------------------------------------------------------
# Pure-JAX reference (mirrors the PyTorch forward) for sanity checking
# ----------------------------------------------------------------------------
def reference_forward(x, params, L):
    h = x
    for w, b in params[:-1]:
        h = jnp.maximum(h @ w + b, 0.0)
    w, b = params[-1]
    out = h @ w + b
    mu_p = out[:, :L] + 1e-9
    sg_p = out[:, L:] + 1e-9
    sum_mu = jnp.sum(mu_p / sg_p**2, axis=0)
    sum_inv = jnp.sum(1.0 / sg_p**2, axis=0)
    sigma_z_sq = 1.0 / (1.0 + sum_inv)
    return sigma_z_sq * sum_mu, sigma_z_sq


if __name__ == "__main__":
    INPUT_DIM = 8          # trajectory_state_class.get_dimensions() (e.g. 7-DoF + time)
    HIDDEN = [32, 32]
    LATENT = 4
    neurons = [INPUT_DIM] + HIDDEN + [2 * LATENT]

    key = jax.random.PRNGKey(0)
    key, xkey = jax.random.split(key)
    x_small = jax.random.normal(xkey, (8, INPUT_DIM), jnp.float32)
    params = init_params(key, neurons)

    fwd = jax.jit(functools.partial(encoder_deep_promp_forward,
                                    latent_variable_dimension=LATENT))

    # ---- Case 1: tiny trajectory (single tile), module-faithful init -------
    mu_z, sigma_z_sq = fwd(x_small, params)
    jax.block_until_ready((mu_z, sigma_z_sq))
    mu_ref, sg_ref = reference_forward(x_small, params, LATENT)
    assert mu_z.shape == (LATENT,) and sigma_z_sq.shape == (LATENT,)
    assert jnp.allclose(mu_z, mu_ref, atol=1e-5, rtol=1e-4)
    assert jnp.allclose(sigma_z_sq, sg_ref, atol=1e-5, rtol=1e-4)

    # ---- Case 2: longer trajectory -> multi-tile grid, masking, 2-core split
    # (sigma-head bias lifted to 2.0 so the 1/sigma^2 terms of a random init
    #  stay well-conditioned for the f32 comparison; kernel semantics unchanged)
    xkey2 = jax.random.fold_in(xkey, 1)
    x_long = jax.random.normal(xkey2, (1000, INPUT_DIM), jnp.float32)
    w_last, b_last = params[-1]
    params_long = params[:-1] + [(w_last, b_last.at[LATENT:].set(2.0))]
    mu_z2, sg_z2 = fwd(x_long, params_long)
    jax.block_until_ready((mu_z2, sg_z2))
    mu_ref2, sg_ref2 = reference_forward(x_long, params_long, LATENT)
    assert jnp.allclose(mu_z2, mu_ref2, atol=1e-4, rtol=5e-3)
    assert jnp.allclose(sg_z2, sg_ref2, atol=1e-6, rtol=5e-3)

    # ---- Case 3: bf16 matmul operands (f32 accumulation / aggregation) -----
    fwd_bf16 = jax.jit(functools.partial(encoder_deep_promp_forward,
                                         latent_variable_dimension=LATENT,
                                         use_bf16=True))
    mu_z3, sg_z3 = fwd_bf16(x_long, params_long)
    jax.block_until_ready((mu_z3, sg_z3))
    assert bool(jnp.all(jnp.isfinite(mu_z3))) and bool(jnp.all(jnp.isfinite(sg_z3)))
    assert jnp.allclose(sg_z3, sg_ref2, rtol=1e-1, atol=1e-3)

    print("KERNEL_OK")
</pallas_src>

<mosaic_0001>
module attributes {stable_mosaic.version = 11 : i64} {
  func.func @kernel(%arg0: i32, %arg1: i32, %arg2: memref<8x8xf32, #tpu.memory_space<vmem>>, %arg3: memref<8x32xf32, #tpu.memory_space<vmem>>, %arg4: memref<1x32xf32, #tpu.memory_space<vmem>>, %arg5: memref<32x32xf32, #tpu.memory_space<vmem>>, %arg6: memref<1x32xf32, #tpu.memory_space<vmem>>, %arg7: memref<32x8xf32, #tpu.memory_space<vmem>>, %arg8: memref<1x8xf32, #tpu.memory_space<vmem>>, %arg9: memref<1x1x4xf32, #tpu.memory_space<vmem>>, %arg10: memref<1x1x4xf32, #tpu.memory_space<vmem>>, %arg11: memref<1x4xf32, #tpu.memory_space<vmem>>, %arg12: memref<1x4xf32, #tpu.memory_space<vmem>>) attributes {dimension_semantics = [#tpu.dimension_semantics<parallel>, #tpu.dimension_semantics<arbitrary>], iteration_bounds = array<i64: 1, 1>, scalar_prefetch = 0 : i64, scratch_operands = 2 : i64, tpu.core_type = #tpu.core_type<tc>, window_params = [{transform_indices = @transform_0, window_bounds = array<i64: 8, 8>}, {pipeline_mode = #tpu.pipeline_mode<synchronous>, transform_indices = @transform_1, window_bounds = array<i64: 8, 32>}, {pipeline_mode = #tpu.pipeline_mode<synchronous>, transform_indices = @transform_2, window_bounds = array<i64: 1, 32>}, {pipeline_mode = #tpu.pipeline_mode<synchronous>, transform_indices = @transform_3, window_bounds = array<i64: 32, 32>}, {pipeline_mode = #tpu.pipeline_mode<synchronous>, transform_indices = @transform_4, window_bounds = array<i64: 1, 32>}, {pipeline_mode = #tpu.pipeline_mode<synchronous>, transform_indices = @transform_5, window_bounds = array<i64: 32, 8>}, {pipeline_mode = #tpu.pipeline_mode<synchronous>, transform_indices = @transform_6, window_bounds = array<i64: 1, 8>}, {transform_indices = @transform_7, window_bounds = array<i64: 1, 1, 4>}, {transform_indices = @transform_8, window_bounds = array<i64: 1, 1, 4>}]} {
    %c0_i32 = arith.constant 0 : i32
    %0 = arith.cmpi eq, %arg1, %c0_i32 : i32
    %1 = arith.extui %0 : i1 to i32
    %c0_i32_0 = arith.constant 0 : i32
    %2 = arith.cmpi ne, %1, %c0_i32_0 : i32
    scf.if %2 {
      %cst_34 = arith.constant 0.000000e+00 : f32
      %58 = vector.broadcast %cst_34 : f32 to vector<1x4xf32>
      %c0_35 = arith.constant 0 : index
      %c0_36 = arith.constant 0 : index
      %59 = vector.load %arg11[%c0_35, %c0_36] : memref<1x4xf32, #tpu.memory_space<vmem>>, vector<1x4xf32>
      tpu.vector_store %arg11[%c0_35, %c0_36], %58 {strides = array<i32>} : memref<1x4xf32, #tpu.memory_space<vmem>>, vector<1x4xf32>,
      %cst_37 = arith.constant 0.000000e+00 : f32
      %60 = vector.broadcast %cst_37 : f32 to vector<1x4xf32>
      %c0_38 = arith.constant 0 : index
      %c0_39 = arith.constant 0 : index
      %61 = vector.load %arg12[%c0_38, %c0_39] : memref<1x4xf32, #tpu.memory_space<vmem>>, vector<1x4xf32>
      tpu.vector_store %arg12[%c0_38, %c0_39], %60 {strides = array<i32>} : memref<1x4xf32, #tpu.memory_space<vmem>>, vector<1x4xf32>,
    } else {
    }
    %c0 = arith.constant 0 : index
    %c0_1 = arith.constant 0 : index
    %3 = vector.load %arg2[%c0, %c0_1] : memref<8x8xf32, #tpu.memory_space<vmem>>, vector<8x8xf32>
    %c0_2 = arith.constant 0 : index
    %c0_3 = arith.constant 0 : index
    %4 = vector.load %arg3[%c0_2, %c0_3] : memref<8x32xf32, #tpu.memory_space<vmem>>, vector<8x32xf32>
    %c0_4 = arith.constant 0 : index
    %c0_5 = arith.constant 0 : index
    %5 = vector.load %arg4[%c0_4, %c0_5] : memref<1x32xf32, #tpu.memory_space<vmem>>, vector<1x32xf32>
    %cst = arith.constant dense<0.000000e+00> : vector<8x32xf32>
    %6 = tpu.matmul %3, %4, %cst {dimension_numbers = #tpu.dot_dimension_numbers<[1], [0], [0], [1], [0, 0, 1, 1], [], []>} : vector<8x8xf32>, vector<8x32xf32>, vector<8x32xf32> -> vector<8x32xf32>
    %7 = vector.broadcast %5 : vector<1x32xf32> to vector<8x32xf32>
    %8 = arith.addf %6, %7 : vector<8x32xf32>
    %cst_6 = arith.constant 0.000000e+00 : f32
    %9 = vector.broadcast %cst_6 : f32 to vector<8x32xf32>
    %10 = arith.maximumf %8, %9 : vector<8x32xf32>
    %c0_7 = arith.constant 0 : index
    %c0_8 = arith.constant 0 : index
    %11 = vector.load %arg5[%c0_7, %c0_8] : memref<32x32xf32, #tpu.memory_space<vmem>>, vector<32x32xf32>
    %c0_9 = arith.constant 0 : index
    %c0_10 = arith.constant 0 : index
    %12 = vector.load %arg6[%c0_9, %c0_10] : memref<1x32xf32, #tpu.memory_space<vmem>>, vector<1x32xf32>
    %cst_11 = arith.constant dense<0.000000e+00> : vector<8x32xf32>
    %13 = tpu.matmul %10, %11, %cst_11 {dimension_numbers = #tpu.dot_dimension_numbers<[1], [0], [0], [1], [0, 0, 1, 1], [], []>} : vector<8x32xf32>, vector<32x32xf32>, vector<8x32xf32> -> vector<8x32xf32>
    %14 = vector.broadcast %12 : vector<1x32xf32> to vector<8x32xf32>
    %15 = arith.addf %13, %14 : vector<8x32xf32>
    %cst_12 = arith.constant 0.000000e+00 : f32
    %16 = vector.broadcast %cst_12 : f32 to vector<8x32xf32>
    %17 = arith.maximumf %15, %16 : vector<8x32xf32>
    %c0_13 = arith.constant 0 : index
    %c0_14 = arith.constant 0 : index
    %18 = vector.load %arg7[%c0_13, %c0_14] : memref<32x8xf32, #tpu.memory_space<vmem>>, vector<32x8xf32>
    %cst_15 = arith.constant dense<0.000000e+00> : vector<8x8xf32>
    %19 = tpu.matmul %17, %18, %cst_15 {dimension_numbers = #tpu.dot_dimension_numbers<[1], [0], [0], [1], [0, 0, 1, 1], [], []>} : vector<8x32xf32>, vector<32x8xf32>, vector<8x8xf32> -> vector<8x8xf32>
    %c0_16 = arith.constant 0 : index
    %c0_17 = arith.constant 0 : index
    %20 = vector.load %arg8[%c0_16, %c0_17] : memref<1x8xf32, #tpu.memory_space<vmem>>, vector<1x8xf32>
    %21 = vector.broadcast %20 : vector<1x8xf32> to vector<8x8xf32>
    %22 = arith.addf %19, %21 : vector<8x8xf32>
    %23 = vector.extract_strided_slice %22 {offsets = [0, 0], sizes = [8, 4], strides = [1, 1]} : vector<8x8xf32> to vector<8x4xf32>
    %24 = vector.extract_strided_slice %22 {offsets = [0, 4], sizes = [8, 4], strides = [1, 1]} : vector<8x8xf32> to vector<8x4xf32>
    %25 = arith.mulf %24, %24 : vector<8x4xf32>
    %cst_18 = arith.constant 1.000000e+00 : f32
    %26 = vector.broadcast %cst_18 : f32 to vector<8x4xf32>
    %27 = arith.divf %26, %25 : vector<8x4xf32>
    %c1_i32 = arith.constant 1 : i32
    %28 = arith.muli %arg0, %c1_i32 : i32
    %29 = arith.addi %28, %arg1 : i32
    %c8_i32 = arith.constant 8 : i32
    %30 = arith.muli %29, %c8_i32 : i32
    %31 = tpu.iota {dimensions = array<i32: 0>} : vector<8x1xi32>
    %32 = vector.broadcast %30 : i32 to vector<8x1xi32>
    %33 = arith.addi %32, %31 : vector<8x1xi32>
    %c8_i32_19 = arith.constant 8 : i32
    %34 = vector.broadcast %c8_i32_19 : i32 to vector<8x1xi32>
    %35 = arith.cmpi slt, %33, %34 : vector<8x1xi32>
    %36 = arith.mulf %23, %27 : vector<8x4xf32>
    %cst_20 = arith.constant 0.000000e+00 : f32
    %37 = vector.shape_cast %35 : vector<8x1xi1> to vector<8x1xi1>
    %38 = vector.broadcast %37 : vector<8x1xi1> to vector<8x4xi1>
    %39 = vector.broadcast %cst_20 : f32 to vector<8x4xf32>
    %40 = arith.select %38, %36, %39 : vector<8x4xi1>, vector<8x4xf32>
    %cst_21 = arith.constant 0.000000e+00 : f32
    %41 = vector.shape_cast %35 : vector<8x1xi1> to vector<8x1xi1>
    %42 = vector.broadcast %41 : vector<8x1xi1> to vector<8x4xi1>
    %43 = vector.broadcast %cst_21 : f32 to vector<8x4xf32>
    %44 = arith.select %42, %27, %43 : vector<8x4xi1>, vector<8x4xf32>
    %c0_22 = arith.constant 0 : index
    %c0_23 = arith.constant 0 : index
    %45 = vector.load %arg11[%c0_22, %c0_23] : memref<1x4xf32, #tpu.memory_space<vmem>>, vector<1x4xf32>
    %cst_24 = arith.constant dense<0.000000e+00> : vector<4xf32>
    %46 = vector.multi_reduction <add>, %40, %cst_24 [0] : vector<8x4xf32> to vector<4xf32>
    %47 = vector.shape_cast %46 : vector<4xf32> to vector<1x4xf32>
    %48 = arith.addf %45, %47 : vector<1x4xf32>
    %c0_25 = arith.constant 0 : index
    %c0_26 = arith.constant 0 : index
    %49 = vector.load %arg11[%c0_25, %c0_26] : memref<1x4xf32, #tpu.memory_space<vmem>>, vector<1x4xf32>
    tpu.vector_store %arg11[%c0_25, %c0_26], %48 {strides = array<i32>} : memref<1x4xf32, #tpu.memory_space<vmem>>, vector<1x4xf32>,
    %c0_27 = arith.constant 0 : index
    %c0_28 = arith.constant 0 : index
    %50 = vector.load %arg12[%c0_27, %c0_28] : memref<1x4xf32, #tpu.memory_space<vmem>>, vector<1x4xf32>
    %cst_29 = arith.constant dense<0.000000e+00> : vector<4xf32>
    %51 = vector.multi_reduction <add>, %44, %cst_29 [0] : vector<8x4xf32> to vector<4xf32>
    %52 = vector.shape_cast %51 : vector<4xf32> to vector<1x4xf32>
    %53 = arith.addf %50, %52 : vector<1x4xf32>
    %c0_30 = arith.constant 0 : index
    %c0_31 = arith.constant 0 : index
    %54 = vector.load %arg12[%c0_30, %c0_31] : memref<1x4xf32, #tpu.memory_space<vmem>>, vector<1x4xf32>
    tpu.vector_store %arg12[%c0_30, %c0_31], %53 {strides = array<i32>} : memref<1x4xf32, #tpu.memory_space<vmem>>, vector<1x4xf32>,
    %c0_i32_32 = arith.constant 0 : i32
    %55 = arith.cmpi eq, %arg1, %c0_i32_32 : i32
    %56 = arith.extui %55 : i1 to i32
    %c0_i32_33 = arith.constant 0 : i32
    %57 = arith.cmpi ne, %56, %c0_i32_33 : i32
    scf.if %57 {
      %c0_34 = arith.constant 0 : index
      %c0_35 = arith.constant 0 : index
      %58 = vector.load %arg11[%c0_34, %c0_35] : memref<1x4xf32, #tpu.memory_space<vmem>>, vector<1x4xf32>
      %59 = vector.shape_cast %58 : vector<1x4xf32> to vector<1x1x4xf32>
      %c0_36 = arith.constant 0 : index
      %c0_37 = arith.constant 0 : index
      %c0_38 = arith.constant 0 : index
      %60 = vector.load %arg9[%c0_36, %c0_37, %c0_38] : memref<1x1x4xf32, #tpu.memory_space<vmem>>, vector<1x1x4xf32>
      tpu.vector_store %arg9[%c0_36, %c0_37, %c0_38], %59 {strides = array<i32>} : memref<1x1x4xf32, #tpu.memory_space<vmem>>, vector<1x1x4xf32>,
      %c0_39 = arith.constant 0 : index
      %c0_40 = arith.constant 0 : index
      %61 = vector.load %arg12[%c0_39, %c0_40] : memref<1x4xf32, #tpu.memory_space<vmem>>, vector<1x4xf32>
      %62 = vector.shape_cast %61 : vector<1x4xf32> to vector<1x1x4xf32>
      %c0_41 = arith.constant 0 : index
      %c0_42 = arith.constant 0 : index
      %c0_43 = arith.constant 0 : index
      %63 = vector.load %arg10[%c0_41, %c0_42, %c0_43] : memref<1x1x4xf32, #tpu.memory_space<vmem>>, vector<1x1x4xf32>
      tpu.vector_store %arg10[%c0_41, %c0_42, %c0_43], %62 {strides = array<i32>} : memref<1x1x4xf32, #tpu.memory_space<vmem>>, vector<1x1x4xf32>,
    } else {
    }
    return
  }
  func.func @transform_0(%arg0: i32, %arg1: i32) -> (i32, i32) {
    %c1_i32 = arith.constant 1 : i32
    %0 = arith.muli %arg0, %c1_i32 : i32
    %1 = arith.addi %0, %arg1 : i32
    %c0_i32 = arith.constant 0 : i32
    %c0_i32_0 = arith.constant 0 : i32
    return %1, %c0_i32 : i32, i32
  }
  func.func @transform_1(%arg0: i32, %arg1: i32) -> (i32, i32) {
    %c0_i32 = arith.constant 0 : i32
    %c0_i32_0 = arith.constant 0 : i32
    %c0_i32_1 = arith.constant 0 : i32
    return %c0_i32, %c0_i32_0 : i32, i32
  }
  func.func @transform_2(%arg0: i32, %arg1: i32) -> (i32, i32) {
    %c0_i32 = arith.constant 0 : i32
    %c0_i32_0 = arith.constant 0 : i32
    %c0_i32_1 = arith.constant 0 : i32
    return %c0_i32, %c0_i32_0 : i32, i32
  }
  func.func @transform_3(%arg0: i32, %arg1: i32) -> (i32, i32) {
    %c0_i32 = arith.constant 0 : i32
    %c0_i32_0 = arith.constant 0 : i32
    %c0_i32_1 = arith.constant 0 : i32
    return %c0_i32, %c0_i32_0 : i32, i32
  }
  func.func @transform_4(%arg0: i32, %arg1: i32) -> (i32, i32) {
    %c0_i32 = arith.constant 0 : i32
    %c0_i32_0 = arith.constant 0 : i32
    %c0_i32_1 = arith.constant 0 : i32
    return %c0_i32, %c0_i32_0 : i32, i32
  }
  func.func @transform_5(%arg0: i32, %arg1: i32) -> (i32, i32) {
    %c0_i32 = arith.constant 0 : i32
    %c0_i32_0 = arith.constant 0 : i32
    %c0_i32_1 = arith.constant 0 : i32
    return %c0_i32, %c0_i32_0 : i32, i32
  }
  func.func @transform_6(%arg0: i32, %arg1: i32) -> (i32, i32) {
    %c0_i32 = arith.constant 0 : i32
    %c0_i32_0 = arith.constant 0 : i32
    %c0_i32_1 = arith.constant 0 : i32
    return %c0_i32, %c0_i32_0 : i32, i32
  }
  func.func @transform_7(%arg0: i32, %arg1: i32) -> (i32, i32, i32) {
    %c0_i32 = arith.constant 0 : i32
    %c0_i32_0 = arith.constant 0 : i32
    %c0_i32_1 = arith.constant 0 : i32
    return %arg0, %c0_i32, %c0_i32_0 : i32, i32, i32
  }
  func.func @transform_8(%arg0: i32, %arg1: i32) -> (i32, i32, i32) {
    %c0_i32 = arith.constant 0 : i32
    %c0_i32_0 = arith.constant 0 : i32
    %c0_i32_1 = arith.constant 0 : i32
    return %arg0, %c0_i32, %c0_i32_0 : i32, i32, i32
  }
}

</mosaic_0001>

<llo_original>
// kernel: encoder_deep_promp_forward.1
$region0: #{encoder_deep_promp_forward.1}
  #allocation0 [shape = 'u32[]', space=smem, size = 0x4, offset = 0x4, fixed_abs, tag = 'smem constant byte address 0x4 - core index']
  #allocation1 [shape = 'u32[144,128]{1,0:T(1,128)}', space=vmem, size = 0x12000, scoped, tag = 'internal scratch']
  #allocation2 [shape = 'f32[1,4]{1,0:T(1,128)}', space=vmem, size = 0x200, scoped, tag = 'scratch operand']
  #allocation3 [shape = 'f32[1,4]{1,0:T(1,128)}', space=vmem, size = 0x200, scoped, tag = 'scratch operand']
  %s0 = inlined_call_operand.vmem [shape: f32[8,8], index: 0, kind: input, shape index: {}]
  %s1 = inlined_call_operand.vmem [shape: f32[8,32], index: 1, kind: input, shape index: {}]
  %s2 = inlined_call_operand.vmem [shape: f32[1,32], index: 2, kind: input, shape index: {}]
  %s3 = inlined_call_operand.vmem [shape: f32[32,32], index: 3, kind: input, shape index: {}]
  %s4 = inlined_call_operand.vmem [shape: f32[1,32], index: 4, kind: input, shape index: {}]
  %s5 = inlined_call_operand.vmem [shape: f32[32,8], index: 5, kind: input, shape index: {}]
  %s6 = inlined_call_operand.vmem [shape: f32[1,8], index: 6, kind: input, shape index: {}]
  %s7 = inlined_call_operand.vmem [shape: f32[1,1,4], index: 7, kind: output, shape index: {0}]
  %s8 = inlined_call_operand.vmem [shape: f32[1,1,4], index: 8, kind: output, shape index: {1}]
  %9 = xla_tuple %s7, %s8
  %s10 = sld [smem:[#allocation0]]
  $region54: #{encoder_deep_promp_forward.1} parent=0
    _
  %s12 = ssub.s32 1, %s10
  %s13 = scalar_select 0, %s12, %s10
  // Predicated region
  $region2: #{encoder_deep_promp_forward.1} parent=0 // pred_check
    _
  $region3: #{encoder_deep_promp_forward.1} parent=0 // pred_check_branch
    %15 = sbr.rel (0) target = $region5
  $region4: #{encoder_deep_promp_forward.1} parent=0 // pred_region
    %s16 = sadd.s32 0, 0
    %p17 = scmp.lt.s32.totalorder %s16, 0
    %s18 = scalar_select %p17, %s16, 0
    %s19 = smul.addr %s18, 8
    %s20 = scalar_lea.vmem %s0, %s19
    %s21 = sadd.s32 0, 0
  $region5: #{encoder_deep_promp_forward.1} parent=0 // pred_fallthru
    _
  // Predicated region
  $region6: #{encoder_deep_promp_forward.1} parent=0 // pred_check
    _
  $region7: #{encoder_deep_promp_forward.1} parent=0 // pred_check_branch
    %23 = sbr.rel (0) target = $region9
  $region8: #{encoder_deep_promp_forward.1} parent=0 // pred_region
    _
  $region9: #{encoder_deep_promp_forward.1} parent=0 // pred_fallthru
    _
  // Predicated region
  $region10: #{encoder_deep_promp_forward.1} parent=0 // pred_check
    _
  $region11: #{encoder_deep_promp_forward.1} parent=0 // pred_check_branch
    %25 = sbr.rel (0) target = $region13
  $region12: #{encoder_deep_promp_forward.1} parent=0 // pred_region
    _
  $region13: #{encoder_deep_promp_forward.1} parent=0 // pred_fallthru
    _
  // Predicated region
  $region14: #{encoder_deep_promp_forward.1} parent=0 // pred_check
    _
  $region15: #{encoder_deep_promp_forward.1} parent=0 // pred_check_branch
    %27 = sbr.rel (0) target = $region17
  $region16: #{encoder_deep_promp_forward.1} parent=0 // pred_region
    _
  $region17: #{encoder_deep_promp_forward.1} parent=0 // pred_fallthru
    _
  // Predicated region
  $region18: #{encoder_deep_promp_forward.1} parent=0 // pred_check
    _
  $region19: #{encoder_deep_promp_forward.1} parent=0 // pred_check_branch
    %29 = sbr.rel (0) target = $region21
  $region20: #{encoder_deep_promp_forward.1} parent=0 // pred_region
    _
  $region21: #{encoder_deep_promp_forward.1} parent=0 // pred_fallthru
    _
  // Predicated region
  $region22: #{encoder_deep_promp_forward.1} parent=0 // pred_check
    _
  $region23: #{encoder_deep_promp_forward.1} parent=0 // pred_check_branch
    %31 = sbr.rel (0) target = $region25
  $region24: #{encoder_deep_promp_forward.1} parent=0 // pred_region
    _
  $region25: #{encoder_deep_promp_forward.1} parent=0 // pred_fallthru
    _
  // Predicated region
  $region26: #{encoder_deep_promp_forward.1} parent=0 // pred_check
    _
  $region27: #{encoder_deep_promp_forward.1} parent=0 // pred_check_branch
    %33 = sbr.rel (0) target = $region29
  $region28: #{encoder_deep_promp_forward.1} parent=0 // pred_region
    _
  $region29: #{encoder_deep_promp_forward.1} parent=0 // pred_fallthru
    _
  %s34 = sadd.s32 0, 0
  %p35 = scmp.lt.s32.totalorder %s34, 0
  %s36 = scalar_select %p35, %s34, 0
  %s37 = smul.addr %s36, 8
  %s38 = scalar_lea.vmem %s0, %s37
  %s39 = sadd.s32 0, 0
  %p40 = scmp.lt.s32.totalorder %s39, 0
  %s41 = scalar_select %p40, %s39, 0
  %s42 = smul.addr %s41, 8
  %s43 = scalar_lea.vmem %s0, %s42
  %s44 = sadd.s32 0, 0
  %p45 = scmp.eq.s32.totalorder 0, 0
  // Predicated region
  $region30: #{encoder_deep_promp_forward.1} parent=0 // pred_check
    %p46 = pneg %p45
  $region31: #{encoder_deep_promp_forward.1} parent=0 // pred_check_branch
    %48 = sbr.rel (%p46) target = $region33
  $region32: #{encoder_deep_promp_forward.1} parent=0 // pred_region
    %vm49 = vcmask 24576
    %50 = vst.msk [vmem:[#allocation2] sm:$0x1] %vm49, 0.0
    %51 = vst.msk [vmem:[#allocation3] sm:$0x1] %vm49, 0.0
  $region33: #{encoder_deep_promp_forward.1} parent=0 // pred_fallthru
    _
  %v52 = vld [vmem:[%s43] sm:$0xff]
  %v53 = vld [vmem:[%s1] sm:$0xff]
  %v54 = vld [vmem:[%s2] sm:$0x1]
  %v56 = vlaneseq
  %v57 = vshrl.u32 %v56, 7
  %v58 = vsub.s32 0, %v57
  %v59 = vrot.slane %v54, %v58
  %vm61 = vcmask 64512
  %v63 = vsel %vm61, %v52, 0
  %65 = vmatprep.subr.mxu0 0.0
  %66 = vmatpush1.msra.mxu0 %v53
  %67 = vmatprep.subr.mxu0 0.0
  %68 = vmatpush1.msra.mxu0 0.0
  %69 = vmatprep.subr.mxu0 0.0
  %70 = vmatpush1.msra.mxu0 0.0
  %71 = vmatprep.subr.mxu0 0.0
  %72 = vmatpush1.msra.mxu0 0.0
  %73 = vmatprep.subr.mxu0 0.0
  %74 = vmatpush1.msra.mxu0 0.0
  %75 = vmatprep.subr.mxu0 0.0
  %76 = vmatpush1.msra.mxu0 0.0
  %77 = vmatprep.subr.mxu0 0.0
  %78 = vmatpush1.msra.mxu0 0.0
  %79 = vmatprep.subr.mxu0 0.0
  %80 = vmatpush1.msra.mxu0 0.0
  %81 = vmatprep.subr.mxu0 0.0
  %82 = vmatpush1.msra.mxu0 0.0
  %83 = vmatprep.subr.mxu0 0.0
  %84 = vmatpush1.msra.mxu0 0.0
  %85 = vmatprep.subr.mxu0 0.0
  %86 = vmatpush1.msra.mxu0 0.0
  %87 = vmatprep.subr.mxu0 0.0
  %88 = vmatpush1.msra.mxu0 0.0
  %89 = vmatprep.subr.mxu0 0.0
  %90 = vmatpush1.msra.mxu0 0.0
  %91 = vmatprep.subr.mxu0 0.0
  %92 = vmatpush1.msra.mxu0 0.0
  %93 = vmatprep.subr.mxu0 0.0
  %94 = vmatpush1.msra.mxu0 0.0
  %95 = vmatprep.subr.mxu0 0.0
  %96 = vmatpush1.msra.mxu0 0.0
  %97 = vmatprep.subr.mxu0 0.0
  %98 = vmatpush1.msra.mxu0 0.0
  %99 = vmatprep.subr.mxu0 0.0
  %100 = vmatpush1.msra.mxu0 0.0
  %101 = vmatprep.subr.mxu0 0.0
  %102 = vmatpush1.msra.mxu0 0.0
  %103 = vmatprep.subr.mxu0 0.0
  %104 = vmatpush1.msra.mxu0 0.0
  %105 = vmatprep.subr.mxu0 0.0
  %106 = vmatpush1.msra.mxu0 0.0
  %107 = vmatprep.subr.mxu0 0.0
  %108 = vmatpush1.msra.mxu0 0.0
  %109 = vmatprep.subr.mxu0 0.0
  %110 = vmatpush1.msra.mxu0 0.0
  %111 = vmatprep.subr.mxu0 0.0
  %112 = vmatpush1.msra.mxu0 0.0
  %113 = vmatprep.subr.mxu0 0.0
  %114 = vmatpush1.msra.mxu0 0.0
  %115 = vmatprep.subr.mxu0 0.0
  %116 = vmatpush1.msra.mxu0 0.0
  %117 = vmatprep.subr.mxu0 0.0
  %118 = vmatpush1.msra.mxu0 0.0
  %119 = vmatprep.subr.mxu0 0.0
  %120 = vmatpush1.msra.mxu0 0.0
  %121 = vmatprep.subr.mxu0 0.0
  %122 = vmatpush1.msra.mxu0 0.0
  %123 = vmatprep.subr.mxu0 0.0
  %124 = vmatpush1.msra.mxu0 0.0
  %125 = vmatprep.subr.mxu0 0.0
  %126 = vmatpush1.msra.mxu0 0.0
  %127 = vmatprep.subr.mxu0 0.0
  %128 = vmatpush1.msra.mxu0 0.0
  %129 = vmatprep.mubr.f32.mxu0 0.0
  %130 = vmatmul.mubr.f32.gmra.mrb[0].mxu0 %v63
  %v131 = vpop.f32.mrb[0].mxu0
  %v132 = vadd.f32 %v59, %v131
  %v133 = vpop.f32.mrb[0].mxu0
  %134 = vdwg.mxu0
  %v135 = vmax.f32 %v132, 0.0
  %v136 = vld [vmem:[%s3] sm:$0xff]
  %v137 = vld [vmem:[%s3 + $0x8] sm:$0xff]
  %v138 = vld [vmem:[%s3 + $0x10] sm:$0xff]
  %v139 = vld [vmem:[%s3 + $0x18] sm:$0xff]
  %v140 = vld [vmem:[%s4] sm:$0x1]
  %v142 = vlaneseq
  %v143 = vshrl.u32 %v142, 7
  %v144 = vsub.s32 0, %v143
  %v145 = vrot.slane %v140, %v144
  %vm147 = vcmask 261120
  %v149 = vsel %vm147, %v135, 0
  %151 = vmatprep.subr.mxu0 0.0
  %152 = vmatpush1.msra.mxu0 %v136
  %153 = vmatprep.subr.mxu0 0.0
  %154 = vmatpush1.msra.mxu0 %v137
  %155 = vmatprep.subr.mxu0 0.0
  %156 = vmatpush1.msra.mxu0 %v138
  %157 = vmatprep.subr.mxu0 0.0
  %158 = vmatpush1.msra.mxu0 %v139
  %159 = vmatprep.subr.mxu0 0.0
  %160 = vmatpush1.msra.mxu0 0.0
  %161 = vmatprep.subr.mxu0 0.0
  %162 = vmatpush1.msra.mxu0 0.0
  %163 = vmatprep.subr.mxu0 0.0
  %164 = vmatpush1.msra.mxu0 0.0
  %165 = vmatprep.subr.mxu0 0.0
  %166 = vmatpush1.msra.mxu0 0.0
  %167 = vmatprep.subr.mxu0 0.0
  %168 = vmatpush1.msra.mxu0 0.0
  %169 = vmatprep.subr.mxu0 0.0
  %170 = vmatpush1.msra.mxu0 0.0
  %171 = vmatprep.subr.mxu0 0.0
  %172 = vmatpush1.msra.mxu0 0.0
  %173 = vmatprep.subr.mxu0 0.0
  %174 = vmatpush1.msra.mxu0 0.0
  %175 = vmatprep.subr.mxu0 0.0
  %176 = vmatpush1.msra.mxu0 0.0
  %177 = vmatprep.subr.mxu0 0.0
  %178 = vmatpush1.msra.mxu0 0.0
  %179 = vmatprep.subr.mxu0 0.0
  %180 = vmatpush1.msra.mxu0 0.0
  %181 = vmatprep.subr.mxu0 0.0
  %182 = vmatpush1.msra.mxu0 0.0
  %183 = vmatprep.subr.mxu0 0.0
  %184 = vmatpush1.msra.mxu0 0.0
  %185 = vmatprep.subr.mxu0 0.0
  %186 = vmatpush1.msra.mxu0 0.0
  %187 = vmatprep.subr.mxu0 0.0
  %188 = vmatpush1.msra.mxu0 0.0
  %189 = vmatprep.subr.mxu0 0.0
  %190 = vmatpush1.msra.mxu0 0.0
  %191 = vmatprep.subr.mxu0 0.0
  %192 = vmatpush1.msra.mxu0 0.0
  %193 = vmatprep.subr.mxu0 0.0
  %194 = vmatpush1.msra.mxu0 0.0
  %195 = vmatprep.subr.mxu0 0.0
  %196 = vmatpush1.msra.mxu0 0.0
  %197 = vmatprep.subr.mxu0 0.0
  %198 = vmatpush1.msra.mxu0 0.0
  %199 = vmatprep.subr.mxu0 0.0
  %200 = vmatpush1.msra.mxu0 0.0
  %201 = vmatprep.subr.mxu0 0.0
  %202 = vmatpush1.msra.mxu0 0.0
  %203 = vmatprep.subr.mxu0 0.0
  %204 = vmatpush1.msra.mxu0 0.0
  %205 = vmatprep.subr.mxu0 0.0
  %206 = vmatpush1.msra.mxu0 0.0
  %207 = vmatprep.subr.mxu0 0.0
  %208 = vmatpush1.msra.mxu0 0.0
  %209 = vmatprep.subr.mxu0 0.0
  %210 = vmatpush1.msra.mxu0 0.0
  %211 = vmatprep.subr.mxu0 0.0
  %212 = vmatpush1.msra.mxu0 0.0
  %213 = vmatprep.subr.mxu0 0.0
  %214 = vmatpush1.msra.mxu0 0.0
  %215 = vmatprep.mubr.f32.mxu0 0.0
  %216 = vmatmul.mubr.f32.gmra.mrb[0].mxu0 %v149
  %v217 = vpop.f32.mrb[0].mxu0
  %v218 = vadd.f32 %v145, %v217
  %v219 = vpop.f32.mrb[0].mxu0
  %220 = vdwg.mxu0
  %v221 = vmax.f32 %v218, 0.0
  %v222 = vld [vmem:[%s5] sm:$0xff]
  %v223 = vld [vmem:[%s5 + $0x8] sm:$0xff]
  %v224 = vld [vmem:[%s5 + $0x10] sm:$0xff]
  %v225 = vld [vmem:[%s5 + $0x18] sm:$0xff]
  %v226 = vld [vmem:[%s6] sm:$0x1]
  %v228 = vlaneseq
  %v229 = vshrl.u32 %v228, 7
  %v230 = vsub.s32 0, %v229
  %v231 = vrot.slane %v226, %v230
  %v234 = vsel %vm147, %v221, 0
  %236 = vmatprep.subr.mxu0 0.0
  %237 = vmatpush1.msra.mxu0 %v222
  %238 = vmatprep.subr.mxu0 0.0
  %239 = vmatpush1.msra.mxu0 %v223
  %240 = vmatprep.subr.mxu0 0.0
  %241 = vmatpush1.msra.mxu0 %v224
  %242 = vmatprep.subr.mxu0 0.0
  %243 = vmatpush1.msra.mxu0 %v225
  %244 = vmatprep.subr.mxu0 0.0
  %245 = vmatpush1.msra.mxu0 0.0
  %246 = vmatprep.subr.mxu0 0.0
  %247 = vmatpush1.msra.mxu0 0.0
  %248 = vmatprep.subr.mxu0 0.0
  %249 = vmatpush1.msra.mxu0 0.0
  %250 = vmatprep.subr.mxu0 0.0
  %251 = vmatpush1.msra.mxu0 0.0
  %252 = vmatprep.subr.mxu0 0.0
  %253 = vmatpush1.msra.mxu0 0.0
  %254 = vmatprep.subr.mxu0 0.0
  %255 = vmatpush1.msra.mxu0 0.0
  %256 = vmatprep.subr.mxu0 0.0
  %257 = vmatpush1.msra.mxu0 0.0
  %258 = vmatprep.subr.mxu0 0.0
  %259 = vmatpush1.msra.mxu0 0.0
  %260 = vmatprep.subr.mxu0 0.0
  %261 = vmatpush1.msra.mxu0 0.0
  %262 = vmatprep.subr.mxu0 0.0
  %263 = vmatpush1.msra.mxu0 0.0
  %264 = vmatprep.subr.mxu0 0.0
  %265 = vmatpush1.msra.mxu0 0.0
  %266 = vmatprep.subr.mxu0 0.0
  %267 = vmatpush1.msra.mxu0 0.0
  %268 = vmatprep.subr.mxu0 0.0
  %269 = vmatpush1.msra.mxu0 0.0
  %270 = vmatprep.subr.mxu0 0.0
  %271 = vmatpush1.msra.mxu0 0.0
  %272 = vmatprep.subr.mxu0 0.0
  %273 = vmatpush1.msra.mxu0 0.0
  %274 = vmatprep.subr.mxu0 0.0
  %275 = vmatpush1.msra.mxu0 0.0
  %276 = vmatprep.subr.mxu0 0.0
  %277 = vmatpush1.msra.mxu0 0.0
  %278 = vmatprep.subr.mxu0 0.0
  %279 = vmatpush1.msra.mxu0 0.0
  %280 = vmatprep.subr.mxu0 0.0
  %281 = vmatpush1.msra.mxu0 0.0
  %282 = vmatprep.subr.mxu0 0.0
  %283 = vmatpush1.msra.mxu0 0.0
  %284 = vmatprep.subr.mxu0 0.0
  %285 = vmatpush1.msra.mxu0 0.0
  %286 = vmatprep.subr.mxu0 0.0
  %287 = vmatpush1.msra.mxu0 0.0
  %288 = vmatprep.subr.mxu0 0.0
  %289 = vmatpush1.msra.mxu0 0.0
  %290 = vmatprep.subr.mxu0 0.0
  %291 = vmatpush1.msra.mxu0 0.0
  %292 = vmatprep.subr.mxu0 0.0
  %293 = vmatpush1.msra.mxu0 0.0
  %294 = vmatprep.subr.mxu0 0.0
  %295 = vmatpush1.msra.mxu0 0.0
  %296 = vmatprep.subr.mxu0 0.0
  %297 = vmatpush1.msra.mxu0 0.0
  %298 = vmatprep.subr.mxu0 0.0
  %299 = vmatpush1.msra.mxu0 0.0
  %300 = vmatprep.mubr.f32.mxu0 0.0
  %301 = vmatmul.mubr.f32.gmra.mrb[0].mxu0 %v234
  %v302 = vpop.f32.mrb[0].mxu0
  %v303 = vadd.f32 %v231, %v302
  %v304 = vpop.f32.mrb[0].mxu0
  %305 = vdwg.mxu0
  %v306 = vmul.f32 %v303, %v303
  %v307 = vrcp.pop %v306
  %v308 = vmul.f32 1.0, %v307
  %s309 = sadd.s32 0, 0
  %s310 = smul.u32 %s309, 8
  %v311 = vlaneseq
  %v312 = vshrl.u32 %v311, 7
  %v313 = vstv %s310
  %v314 = vadd.s32 %v313, %v312
  %vm315 = vcmp.lt.s32.totalorder %v314, 8
  %317 = vrot.lane.b32.xlu0 %v308, 124
  %v318 = vpop.permute.xlu0 %317
  %v320 = vmul.f32 %v303, %v318
  %v321 = vsel %vm315, 1, 0
  %vm322 = vcmp.eq.s32.totalorder %v321, 1
  %v323 = vsel %vm322, %v320, 0.0
  %v324 = vsel %vm322, %v308, 0.0
  %v325 = vld [vmem:[#allocation2] sm:$0x1]
  %vm326 = vcmask 31744
  %v327 = vsel %vm326, %v323, 0.0
  %v328 = vrot.slane %v327, 4
  %v329 = vadd.f32 %v327, %v328
  %v330 = vrot.slane %v329, 2
  %v331 = vadd.f32 %v329, %v330
  %v332 = vrot.slane %v331, 1
  %v333 = vadd.f32 %v331, %v332
  %v334 = vadd.f32 %v325, %v333
  %vm335 = vcmask 24576
  %336 = vst.msk [vmem:[#allocation2] sm:$0x1] %vm335, %v334
  %v337 = vld [vmem:[#allocation3] sm:$0x1]
  %vm338 = vcmask 64544
  %v339 = vsel %vm338, %v324, 0.0
  %v340 = vrot.slane %v339, 4
  %v341 = vadd.f32 %v339, %v340
  %v342 = vrot.slane %v341, 2
  %v343 = vadd.f32 %v341, %v342
  %v344 = vrot.slane %v343, 1
  %v345 = vadd.f32 %v343, %v344
  %v348 = vunpack.c.l.s4 1966171168
  %v349 = vunpack.c.0.s8 %v348
  %v350 = vlaneseq
  %v351 = vshrl.u32 %v350, 7
  %v352 = vsub.s32 %v349, %v351
  %v353 = vrot.slane %v345, %v352
  %v355 = vunpack.c.l.s4 1966171168
  %v356 = vunpack.c.0.s8 %v355
  %v357 = vlaneseq
  %v358 = vshrl.u32 %v357, 7
  %v359 = vsub.s32 %v356, %v358
  %v360 = vrot.slane %v353, %v359
  %361 = vrot.lane.b32.xlu0 %v360, 124
  %v362 = vpop.permute.xlu0 %361
  %v364 = vadd.f32 %v337, %v362
  %365 = vst.msk [vmem:[#allocation3] sm:$0x1] %vm335, %v364
  // Predicated region
  $region34: #{encoder_deep_promp_forward.1} parent=0 // pred_check
    %p366 = pneg %p45
  $region35: #{encoder_deep_promp_forward.1} parent=0 // pred_check_branch
    %368 = sbr.rel (%p366) target = $region37
  $region36: #{encoder_deep_promp_forward.1} parent=0 // pred_region
    %v369 = vld [vmem:[#allocation2] sm:$0x1]
    %370 = vst.msk [vmem:[%s7] sm:$0x1] %vm335, %v369
    %v371 = vld [vmem:[#allocation3] sm:$0x1]
    %372 = vst.msk [vmem:[%s8] sm:$0x1] %vm335, %v371
  $region37: #{encoder_deep_promp_forward.1} parent=0 // pred_fallthru
    _
  // Predicated region
  $region38: #{encoder_deep_promp_forward.1} parent=0 // pred_check
    _
  $region39: #{encoder_deep_promp_forward.1} parent=0 // pred_check_branch
    %374 = sbr.rel (0) target = $region41
  $region40: #{encoder_deep_promp_forward.1} parent=0 // pred_region
    _
  $region41: #{encoder_deep_promp_forward.1} parent=0 // pred_fallthru
    _
  // Predicated region
  $region42: #{encoder_deep_promp_forward.1} parent=0 // pred_check
    _
  $region43: #{encoder_deep_promp_forward.1} parent=0 // pred_check_branch
    %376 = sbr.rel (0) target = $region45
  $region44: #{encoder_deep_promp_forward.1} parent=0 // pred_region
    _
  $region45: #{encoder_deep_promp_forward.1} parent=0 // pred_fallthru
    _
  // Predicated region
  $region46: #{encoder_deep_promp_forward.1} parent=0 // pred_check
    _
  $region47: #{encoder_deep_promp_forward.1} parent=0 // pred_check_branch
    %378 = sbr.rel (0) target = $region49
  $region48: #{encoder_deep_promp_forward.1} parent=0 // pred_region
    _
  $region49: #{encoder_deep_promp_forward.1} parent=0 // pred_fallthru
    _
  // Predicated region
  $region50: #{encoder_deep_promp_forward.1} parent=0 // pred_check
    _
  $region51: #{encoder_deep_promp_forward.1} parent=0 // pred_check_branch
    %380 = sbr.rel (0) target = $region53
  $region52: #{encoder_deep_promp_forward.1} parent=0 // pred_region
    _
  $region53: #{encoder_deep_promp_forward.1} parent=0 // pred_fallthru
    _

</llo_original>
